<compile_context>
chip_gen: v7x
topology: tpu7x:2x2x1
jax: 0.10.0
libtpu: 0.0.40
codegen_flags: <defaults>
</compile_context>

<pallas_src>
import math
import functools

import jax
import jax.numpy as jnp
from jax import lax
from jax.experimental import pallas as pl
from jax.experimental.pallas import tpu as pltpu


# ----------------------------------------------------------------------------
# Tiling helper
# ----------------------------------------------------------------------------
def _pick_tile(dim, preferred, align):
    """Largest power-of-2-scaled tile <= preferred that divides dim, else full dim."""
    if dim <= preferred:
        return dim
    t = preferred
    while t >= align:
        if dim % t == 0:
            return t
        t //= 2
    return dim


# ----------------------------------------------------------------------------
# Tiled linear kernel: y = x @ w + b   (bias fused into the K-loop epilogue)
# ----------------------------------------------------------------------------
def _linear_kernel(x_ref, w_ref, b_ref, o_ref, acc_ref):
    @pl.when(pl.program_id(2) == 0)
    def _():
        acc_ref[...] = jnp.zeros_like(acc_ref)

    acc_ref[...] += jnp.dot(x_ref[...], w_ref[...],
                            preferred_element_type=jnp.float32)

    @pl.when(pl.program_id(2) == pl.num_programs(2) - 1)
    def _():
        o_ref[...] = (acc_ref[...] + b_ref[...].astype(jnp.float32)).astype(o_ref.dtype)


def _linear(x2d, w, b, *, out_dtype=jnp.float32):
    """x2d: (M, K), w: (K, N), b: (N,) -> (M, N) f32 (tiled, pipelined)."""
    M, K = x2d.shape
    _, N = w.shape
    TM = _pick_tile(M, 256, 8)
    TN = _pick_tile(N, 256, 128)
    TK = _pick_tile(K, 512, 128)
    grid = (M // TM, N // TN, K // TK)
    return pl.pallas_call(
        _linear_kernel,
        out_shape=jax.ShapeDtypeStruct((M, N), out_dtype),
        grid=grid,
        in_specs=[
            pl.BlockSpec((TM, TK), lambda i, j, k: (i, k)),
            pl.BlockSpec((TK, TN), lambda i, j, k: (k, j)),
            pl.BlockSpec((1, TN), lambda i, j, k: (0, j)),
        ],
        out_specs=pl.BlockSpec((TM, TN), lambda i, j, k: (i, j)),
        scratch_shapes=[pltpu.VMEM((TM, TN), jnp.float32)],
        compiler_params=pltpu.CompilerParams(
            dimension_semantics=("parallel", "parallel", "arbitrary"),
            vmem_limit_bytes=32 * 1024 * 1024,
        ),
    )(x2d, w, b.reshape(1, N))


# ----------------------------------------------------------------------------
# Attention kernel: one (batch, q-tile) per grid step, all heads in one step.
# Inputs stay in (B, S, D) layout -> no head-split/merge transposes in XLA.
# ----------------------------------------------------------------------------
def _attention_kernel(q_ref, k_ref, v_ref, m_ref, o_ref, *, num_heads, d_k, scale):
    q = q_ref[0]          # (TQ, D)
    k = k_ref[0]          # (Skv, D)
    v = v_ref[0]          # (Skv, D)
    # int8 mask -> bool "keep" once per grid step (shared by all heads).
    keep = m_ref[0, 0].astype(jnp.int32) != 0          # (TQ, Skv)
    neg = jnp.float32(-1e9)

    ctxs = []
    for h in range(num_heads):
        lo = h * d_k
        qh = q[:, lo:lo + d_k]
        kh = k[:, lo:lo + d_k]
        vh = v[:, lo:lo + d_k]
        # scores = q @ k^T / sqrt(d_k) without materializing a transpose.
        s = lax.dot_general(qh, kh, (((1,), (1,)), ((), ())),
                            preferred_element_type=jnp.float32) * scale
        s = jnp.where(keep, s, neg)                      # masked_fill(mask == 0, -1e9)
        s = s - jnp.max(s, axis=-1, keepdims=True)       # stable softmax
        p = jnp.exp(s)
        p = p * pl.reciprocal(jnp.sum(p, axis=-1, keepdims=True), approx=True)
        # TODO(synk): dropout on attention probabilities omitted (inference semantics).
        ctxs.append(jnp.dot(p.astype(vh.dtype), vh,
                            preferred_element_type=jnp.float32))
    # Single lane-dense store of the merged heads: (TQ, D).
    o_ref[0] = jnp.concatenate(ctxs, axis=-1).astype(o_ref.dtype)


def _attention(q, k, v, mask_keep_i8, num_heads):
    """q: (B, Sq, D), k/v: (B, Skv, D), mask: (B, 1, Sq, Skv) int8 -> (B, Sq, D) f32."""
    B, Sq, D = q.shape
    Skv = k.shape[1]
    d_k = D // num_heads
    TQ = _pick_tile(Sq, 256, 8)
    kernel = functools.partial(_attention_kernel, num_heads=num_heads, d_k=d_k,
                               scale=1.0 / math.sqrt(d_k))
    return pl.pallas_call(
        kernel,
        out_shape=jax.ShapeDtypeStruct((B, Sq, D), jnp.float32),
        grid=(B, Sq // TQ),
        in_specs=[
            pl.BlockSpec((1, TQ, D), lambda b, qi: (b, qi, 0)),
            pl.BlockSpec((1, Skv, D), lambda b, qi: (b, 0, 0)),
            pl.BlockSpec((1, Skv, D), lambda b, qi: (b, 0, 0)),
            pl.BlockSpec((1, 1, TQ, Skv), lambda b, qi: (b, 0, qi, 0)),
        ],
        out_specs=pl.BlockSpec((1, TQ, D), lambda b, qi: (b, qi, 0)),
        compiler_params=pltpu.CompilerParams(
            dimension_semantics=("parallel", "parallel"),
            vmem_limit_bytes=32 * 1024 * 1024,
        ),
    )(q, k, v, mask_keep_i8)


# ----------------------------------------------------------------------------
# Module wrapper
# ----------------------------------------------------------------------------
class MultiHeadAttentionBlockPallas:
    def __init__(self, d_model: int, h: int, dropout: float, key,
                 compute_dtype=jnp.float32):
        assert d_model % h == 0, "d_model is not divisible by h"
        self.d_model = d_model
        self.h = h
        self.d_k = d_model // h
        self.dropout = dropout            # unused at inference
        self.compute_dtype = compute_dtype

        # torch.nn.Linear default init: U(-1/sqrt(fan_in), 1/sqrt(fan_in)).
        # Weights stored as (d_in, d_out).
        bound = 1.0 / math.sqrt(d_model)
        ks = jax.random.split(key, 8)

        def init(kw, kb):
            w = jax.random.uniform(kw, (d_model, d_model), jnp.float32, -bound, bound)
            b = jax.random.uniform(kb, (d_model,), jnp.float32, -bound, bound)
            return w, b

        self.w_q, self.b_q = init(ks[0], ks[1])
        self.w_k, self.b_k = init(ks[2], ks[3])
        self.w_v, self.b_v = init(ks[4], ks[5])
        self.w_o, self.b_o = init(ks[6], ks[7])

        # Fused QKV weight for the self-attention fast path.
        self.w_qkv = jnp.concatenate([self.w_q, self.w_k, self.w_v], axis=1)  # (D, 3D)
        self.b_qkv = jnp.concatenate([self.b_q, self.b_k, self.b_v])          # (3D,)

    def _cast(self, x):
        return x if x.dtype == self.compute_dtype else x.astype(self.compute_dtype)

    def __call__(self, q, k, v, mask=None):
        B, Sq, D = q.shape
        Skv = k.shape[1]
        H = self.h
        c = self._cast

        if (q is k) and (k is v):
            # Self-attention: one fused QKV projection (single tiled matmul).
            qkv = _linear(c(q.reshape(B * Sq, D)), c(self.w_qkv), self.b_qkv)
            qkv = qkv.reshape(B, Sq, 3 * D)
            query = qkv[:, :, :D]
            key_ = qkv[:, :, D:2 * D]
            value = qkv[:, :, 2 * D:]
        else:
            # Cross-attention: separate (still tiled) projections.
            query = _linear(c(q.reshape(B * Sq, D)), c(self.w_q), self.b_q).reshape(B, Sq, D)
            key_ = _linear(c(k.reshape(B * Skv, D)), c(self.w_k), self.b_k).reshape(B, Skv, D)
            value = _linear(c(v.reshape(B * Skv, D)), c(self.w_v), self.b_v).reshape(B, Skv, D)

        if mask is None:
            mask_keep = jnp.ones((B, 1, Sq, Skv), jnp.int8)
        else:
            mask_keep = jnp.broadcast_to((mask != 0).astype(jnp.int8), (B, 1, Sq, Skv))

        # Attention works directly on (B, S, D): no head transposes materialized.
        ctx = _attention(c(query), c(key_), c(value), mask_keep, H)   # (B, Sq, D) f32

        out = _linear(c(ctx.reshape(B * Sq, D)), c(self.w_o), self.b_o)
        return out.reshape(B, Sq, D)


# ----------------------------------------------------------------------------
# Pure-JAX reference for sanity checking
# ----------------------------------------------------------------------------
def _reference(block, q, k, v, mask):
    B, Sq, D = q.shape
    Skv = k.shape[1]
    H, d_k = block.h, block.d_k
    query = q @ block.w_q + block.b_q
    key_ = k @ block.w_k + block.b_k
    value = v @ block.w_v + block.b_v
    qh = query.reshape(B, Sq, H, d_k).transpose(0, 2, 1, 3)
    kh = key_.reshape(B, Skv, H, d_k).transpose(0, 2, 1, 3)
    vh = value.reshape(B, Skv, H, d_k).transpose(0, 2, 1, 3)
    scores = jnp.einsum("bhqd,bhkd->bhqk", qh, kh) / math.sqrt(d_k)
    if mask is not None:
        scores = jnp.where(mask == 0, -1e9, scores)
    probs = jax.nn.softmax(scores, axis=-1)
    ctx = jnp.einsum("bhqk,bhkd->bhqd", probs, vh)
    ctx = ctx.transpose(0, 2, 1, 3).reshape(B, Sq, D)
    return ctx @ block.w_o + block.b_o


# ----------------------------------------------------------------------------
if __name__ == "__main__":
    B, S, d_model, H = 2, 8, 32, 4

    root = jax.random.PRNGKey(0)
    k_param, k_x, k_enc = jax.random.split(root, 3)

    block = MultiHeadAttentionBlockPallas(d_model, H, dropout=0.0, key=k_param)

    # --- Self-attention (fused QKV path) with a causal mask --------------------
    x = jax.random.normal(k_x, (B, S, d_model), jnp.float32)
    causal = jnp.tril(jnp.ones((S, S), jnp.int32))
    mask = jnp.broadcast_to(causal[None, None, :, :], (B, 1, S, S))

    out = block(x, x, x, mask)
    jax.block_until_ready(out)
    ref = _reference(block, x, x, x, mask)
    assert out.shape == (B, S, d_model)
    assert jnp.allclose(out, ref, atol=2e-3, rtol=2e-3), "self-attention mismatch"

    # --- Cross-attention (separate projections, different q/kv lengths) --------
    S_kv = 16
    enc = jax.random.normal(k_enc, (B, S_kv, d_model), jnp.float32)
    xmask = jnp.ones((B, 1, S, S_kv), jnp.int32)
    out2 = block(x, enc, enc, xmask)
    jax.block_until_ready(out2)
    ref2 = _reference(block, x, enc, enc, xmask)
    assert out2.shape == (B, S, d_model)
    assert jnp.allclose(out2, ref2, atol=2e-3, rtol=2e-3), "cross-attention mismatch"

    # --- bf16 compute path (MXU-friendly; f32 accumulation), looser tolerance --
    block_bf16 = MultiHeadAttentionBlockPallas(d_model, H, dropout=0.0, key=k_param,
                                               compute_dtype=jnp.bfloat16)
    out3 = block_bf16(x, x, x, mask)
    jax.block_until_ready(out3)
    assert out3.shape == (B, S, d_model)
    assert jnp.allclose(out3, ref, atol=5e-2, rtol=5e-2), "bf16 path mismatch"

    print("KERNEL_OK")
</pallas_src>

<mosaic_0001>
module attributes {stable_mosaic.version = 11 : i64} {
  func.func @_linear_kernel(%arg0: i32, %arg1: i32, %arg2: i32, %arg3: memref<16x32xf32, #tpu.memory_space<vmem>>, %arg4: memref<32x96xf32, #tpu.memory_space<vmem>>, %arg5: memref<1x96xf32, #tpu.memory_space<vmem>>, %arg6: memref<16x96xf32, #tpu.memory_space<vmem>>, %arg7: memref<16x96xf32, #tpu.memory_space<vmem>>) attributes {dimension_semantics = [#tpu.dimension_semantics<parallel>, #tpu.dimension_semantics<parallel>, #tpu.dimension_semantics<arbitrary>], iteration_bounds = array<i64: 1, 1, 1>, scalar_prefetch = 0 : i64, scratch_operands = 1 : i64, tpu.core_type = #tpu.core_type<tc>, window_params = [{transform_indices = @transform_0, window_bounds = array<i64: 16, 32>}, {transform_indices = @transform_1, window_bounds = array<i64: 32, 96>}, {transform_indices = @transform_2, window_bounds = array<i64: 1, 96>}, {transform_indices = @transform_3, window_bounds = array<i64: 16, 96>}]} {
    %c0_i32 = arith.constant 0 : i32
    %0 = arith.cmpi eq, %arg2, %c0_i32 : i32
    %1 = arith.extui %0 : i1 to i32
    %c0_i32_0 = arith.constant 0 : i32
    %2 = arith.cmpi ne, %1, %c0_i32_0 : i32
    scf.if %2 {
      %cst_10 = arith.constant 0.000000e+00 : f32
      %12 = vector.broadcast %cst_10 : f32 to vector<16x96xf32>
      %c0_11 = arith.constant 0 : index
      %c0_12 = arith.constant 0 : index
      %13 = vector.load %arg7[%c0_11, %c0_12] : memref<16x96xf32, #tpu.memory_space<vmem>>, vector<16x96xf32>
      tpu.vector_store %arg7[%c0_11, %c0_12], %12 {strides = array<i32>} : memref<16x96xf32, #tpu.memory_space<vmem>>, vector<16x96xf32>,
    } else {
    }
    %c0 = arith.constant 0 : index
    %c0_1 = arith.constant 0 : index
    %3 = vector.load %arg7[%c0, %c0_1] : memref<16x96xf32, #tpu.memory_space<vmem>>, vector<16x96xf32>
    %c0_2 = arith.constant 0 : index
    %c0_3 = arith.constant 0 : index
    %4 = vector.load %arg3[%c0_2, %c0_3] : memref<16x32xf32, #tpu.memory_space<vmem>>, vector<16x32xf32>
    %c0_4 = arith.constant 0 : index
    %c0_5 = arith.constant 0 : index
    %5 = vector.load %arg4[%c0_4, %c0_5] : memref<32x96xf32, #tpu.memory_space<vmem>>, vector<32x96xf32>
    %cst = arith.constant dense<0.000000e+00> : vector<16x96xf32>
    %6 = tpu.matmul %4, %5, %cst {dimension_numbers = #tpu.dot_dimension_numbers<[1], [0], [0], [1], [0, 0, 1, 1], [], []>} : vector<16x32xf32>, vector<32x96xf32>, vector<16x96xf32> -> vector<16x96xf32>
    %7 = arith.addf %3, %6 : vector<16x96xf32>
    %c0_6 = arith.constant 0 : index
    %c0_7 = arith.constant 0 : index
    %8 = vector.load %arg7[%c0_6, %c0_7] : memref<16x96xf32, #tpu.memory_space<vmem>>, vector<16x96xf32>
    tpu.vector_store %arg7[%c0_6, %c0_7], %7 {strides = array<i32>} : memref<16x96xf32, #tpu.memory_space<vmem>>, vector<16x96xf32>,
    %c0_i32_8 = arith.constant 0 : i32
    %9 = arith.cmpi eq, %arg2, %c0_i32_8 : i32
    %10 = arith.extui %9 : i1 to i32
    %c0_i32_9 = arith.constant 0 : i32
    %11 = arith.cmpi ne, %10, %c0_i32_9 : i32
    scf.if %11 {
      %c0_10 = arith.constant 0 : index
      %c0_11 = arith.constant 0 : index
      %12 = vector.load %arg7[%c0_10, %c0_11] : memref<16x96xf32, #tpu.memory_space<vmem>>, vector<16x96xf32>
      %c0_12 = arith.constant 0 : index
      %c0_13 = arith.constant 0 : index
      %13 = vector.load %arg5[%c0_12, %c0_13] : memref<1x96xf32, #tpu.memory_space<vmem>>, vector<1x96xf32>
      %14 = vector.broadcast %13 : vector<1x96xf32> to vector<16x96xf32>
      %15 = arith.addf %12, %14 : vector<16x96xf32>
      %c0_14 = arith.constant 0 : index
      %c0_15 = arith.constant 0 : index
      %16 = vector.load %arg6[%c0_14, %c0_15] : memref<16x96xf32, #tpu.memory_space<vmem>>, vector<16x96xf32>
      tpu.vector_store %arg6[%c0_14, %c0_15], %15 {strides = array<i32>} : memref<16x96xf32, #tpu.memory_space<vmem>>, vector<16x96xf32>,
    } else {
    }
    return
  }
  func.func @transform_0(%arg0: i32, %arg1: i32, %arg2: i32) -> (i32, i32) {
    %c0_i32 = arith.constant 0 : i32
    return %arg0, %arg2 : i32, i32
  }
  func.func @transform_1(%arg0: i32, %arg1: i32, %arg2: i32) -> (i32, i32) {
    %c0_i32 = arith.constant 0 : i32
    return %arg2, %arg1 : i32, i32
  }
  func.func @transform_2(%arg0: i32, %arg1: i32, %arg2: i32) -> (i32, i32) {
    %c0_i32 = arith.constant 0 : i32
    %c0_i32_0 = arith.constant 0 : i32
    return %c0_i32, %arg1 : i32, i32
  }
  func.func @transform_3(%arg0: i32, %arg1: i32, %arg2: i32) -> (i32, i32) {
    %c0_i32 = arith.constant 0 : i32
    return %arg0, %arg1 : i32, i32
  }
}

</mosaic_0001>

<llo_original>
// kernel: tpu_custom_call.1
$region0: #{tpu_custom_call.1}
  #allocation0 [shape = 'u32[]', space=smem, size = 0x4, offset = 0x4, fixed_abs, tag = 'smem constant byte address 0x4 - core index']
  #allocation1 [shape = 'u32[144,128]{1,0:T(1,128)}', space=vmem, size = 0x12000, scoped, tag = 'internal scratch']
  #allocation2 [shape = 'f32[16,96]{1,0:T(8,128)}', space=vmem, size = 0x2000, scoped, tag = 'scratch operand']
  %s0 = inlined_call_operand.hbm [shape: f32[16,32], index: 0, kind: input, shape index: {}]
  %s1 = inlined_call_operand.hbm [shape: f32[32,96], index: 1, kind: input, shape index: {}]
  %s2 = inlined_call_operand.vmem [shape: f32[1,96], index: 2, kind: input, shape index: {}]
  %s3 = inlined_call_operand.hbm [shape: f32[16,96], index: 3, kind: output, shape index: {}]
  %s4 = sld [smem:[#allocation0]]
  $region38: #{tpu_custom_call.1} parent=0
    _
  %s6 = ssub.s32 1, %s4
  %s7 = scalar_select 0, %s6, %s4
  $region1: #{tpu_custom_call.1} parent=0
    #allocation3 [shape = 'u8[8192]{0}', space=vmem, size = 0x2000, scoped, tag = 'input window, operand 0, single buffered']
    #allocation4 [shape = 's32[1]{0}', space=sflag, size = 0x4, scoped, tag = 'scoped memory for tpu_custom_call.1']
    #allocation5 [shape = 's32[1]{0}', space=sflag, size = 0x4, scoped, tag = 'scoped memory for tpu_custom_call.1']
    #allocation6 [shape = 'u8[16384]{0}', space=vmem, size = 0x4000, scoped, tag = 'input window, operand 1, single buffered']
    #allocation7 [shape = 's32[1]{0}', space=sflag, size = 0x4, scoped, tag = 'scoped memory for tpu_custom_call.1']
    #allocation8 [shape = 'u8[8192]{0}', space=vmem, size = 0x2000, scoped, tag = 'output window, operand 0, single buffered']
    %8 = vsyncpa [#allocation4], 0
    %9 = vsyncpa [#allocation7], 0
    %10 = vsyncpa [#allocation5], 0
    // Predicated region
    $region2: #{tpu_custom_call.1} parent=1 // pred_check
      _
    $region3: #{tpu_custom_call.1} parent=1 // pred_check_branch
      %12 = sbr.rel (0) target = $region5
    $region4: #{tpu_custom_call.1} parent=1 // pred_region
      %s14 = ssub.s32 256, 256
      %15 = vsyncadd [#allocation4], %s14
      %s16 = sshll.u32 [#allocation3], 4
      %s17 = int_to_ptr.vmem [resolvable:$true] %s16
      %22 = dma.hbm_to_vmem [thread:$0]  %s0, 256, %s17, [#allocation4], 128, 128, 8
    $region5: #{tpu_custom_call.1} parent=1 // pred_fallthru
      _
    // Predicated region
    $region6: #{tpu_custom_call.1} parent=1 // pred_check
      _
    $region7: #{tpu_custom_call.1} parent=1 // pred_check_branch
      %24 = sbr.rel (0) target = $region9
    $region8: #{tpu_custom_call.1} parent=1 // pred_region
      %s26 = ssub.s32 512, 512
      %27 = vsyncadd [#allocation7], %s26
      %s28 = sshll.u32 [#allocation6], 4
      %s29 = int_to_ptr.vmem [resolvable:$true] %s28
      %34 = dma.hbm_to_vmem [thread:$0]  %s1, 512, %s29, [#allocation7], 128, 128, 8
    $region9: #{tpu_custom_call.1} parent=1 // pred_fallthru
      _
    // Predicated region
    $region10: #{tpu_custom_call.1} parent=1 // pred_check
      _
    $region11: #{tpu_custom_call.1} parent=1 // pred_check_branch
      %36 = sbr.rel (0) target = $region13
    $region12: #{tpu_custom_call.1} parent=1 // pred_region
      _
    $region13: #{tpu_custom_call.1} parent=1 // pred_fallthru
      _
    // Predicated region
    $region14: #{tpu_custom_call.1} parent=1 // pred_check
      _
    $region15: #{tpu_custom_call.1} parent=1 // pred_check_branch
      %38 = sbr.rel (0) target = $region17
    $region16: #{tpu_custom_call.1} parent=1 // pred_region
      %39 = dma.done [#allocation4], 256
    $region17: #{tpu_custom_call.1} parent=1 // pred_fallthru
      _
    // Predicated region
    $region18: #{tpu_custom_call.1} parent=1 // pred_check
      _
    $region19: #{tpu_custom_call.1} parent=1 // pred_check_branch
      %41 = sbr.rel (0) target = $region21
    $region20: #{tpu_custom_call.1} parent=1 // pred_region
      %42 = dma.done [#allocation7], 512
    $region21: #{tpu_custom_call.1} parent=1 // pred_fallthru
      _
    %p43 = scmp.eq.s32.totalorder 0, 0
    // Predicated region
    $region22: #{tpu_custom_call.1} parent=1 // pred_check
      %p44 = pneg %p43
    $region23: #{tpu_custom_call.1} parent=1 // pred_check_branch
      %46 = sbr.rel (%p44) target = $region25
    $region24: #{tpu_custom_call.1} parent=1 // pred_region
      %vm47 = vcmask 785408
      %48 = vst.msk [vmem:[#allocation2] sm:$0xff] %vm47, 0.0
      %49 = vst.msk [vmem:[#allocation2 + $0x8] sm:$0xff] %vm47, 0.0
    $region25: #{tpu_custom_call.1} parent=1 // pred_fallthru
      _
    %v50 = vld [vmem:[#allocation2] sm:$0xff]
    %v51 = vld [vmem:[#allocation2 + $0x8] sm:$0xff]
    %v52 = vld [vmem:[#allocation3] sm:$0xff]
    %v53 = vld [vmem:[#allocation3 + $0x8] sm:$0xff]
    %v54 = vld [vmem:[#allocation6] sm:$0xff]
    %v55 = vld [vmem:[#allocation6 + $0x8] sm:$0xff]
    %v56 = vld [vmem:[#allocation6 + $0x10] sm:$0xff]
    %v57 = vld [vmem:[#allocation6 + $0x18] sm:$0xff]
    %vm58 = vcmask 261120
    %v60 = vsel %vm58, %v52, 0
    %v63 = vsel %vm58, %v53, 0
    %65 = vmatprep.subr.mxu0 0.0
    %66 = vmatpush1.msra.mxu0 %v54
    %67 = vmatprep.subr.mxu0 0.0
    %68 = vmatpush1.msra.mxu0 %v55
    %69 = vmatprep.subr.mxu0 0.0
    %70 = vmatpush1.msra.mxu0 %v56
    %71 = vmatprep.subr.mxu0 0.0
    %72 = vmatpush1.msra.mxu0 %v57
    %73 = vmatprep.subr.mxu0 0.0
    %74 = vmatpush1.msra.mxu0 0.0
    %75 = vmatprep.subr.mxu0 0.0
    %76 = vmatpush1.msra.mxu0 0.0
    %77 = vmatprep.subr.mxu0 0.0
    %78 = vmatpush1.msra.mxu0 0.0
    %79 = vmatprep.subr.mxu0 0.0
    %80 = vmatpush1.msra.mxu0 0.0
    %81 = vmatprep.subr.mxu0 0.0
    %82 = vmatpush1.msra.mxu0 0.0
    %83 = vmatprep.subr.mxu0 0.0
    %84 = vmatpush1.msra.mxu0 0.0
    %85 = vmatprep.subr.mxu0 0.0
    %86 = vmatpush1.msra.mxu0 0.0
    %87 = vmatprep.subr.mxu0 0.0
    %88 = vmatpush1.msra.mxu0 0.0
    %89 = vmatprep.subr.mxu0 0.0
    %90 = vmatpush1.msra.mxu0 0.0
    %91 = vmatprep.subr.mxu0 0.0
    %92 = vmatpush1.msra.mxu0 0.0
    %93 = vmatprep.subr.mxu0 0.0
    %94 = vmatpush1.msra.mxu0 0.0
    %95 = vmatprep.subr.mxu0 0.0
    %96 = vmatpush1.msra.mxu0 0.0
    %97 = vmatprep.subr.mxu0 0.0
    %98 = vmatpush1.msra.mxu0 0.0
    %99 = vmatprep.subr.mxu0 0.0
    %100 = vmatpush1.msra.mxu0 0.0
    %101 = vmatprep.subr.mxu0 0.0
    %102 = vmatpush1.msra.mxu0 0.0
    %103 = vmatprep.subr.mxu0 0.0
    %104 = vmatpush1.msra.mxu0 0.0
    %105 = vmatprep.subr.mxu0 0.0
    %106 = vmatpush1.msra.mxu0 0.0
    %107 = vmatprep.subr.mxu0 0.0
    %108 = vmatpush1.msra.mxu0 0.0
    %109 = vmatprep.subr.mxu0 0.0
    %110 = vmatpush1.msra.mxu0 0.0
    %111 = vmatprep.subr.mxu0 0.0
    %112 = vmatpush1.msra.mxu0 0.0
    %113 = vmatprep.subr.mxu0 0.0
    %114 = vmatpush1.msra.mxu0 0.0
    %115 = vmatprep.subr.mxu0 0.0
    %116 = vmatpush1.msra.mxu0 0.0
    %117 = vmatprep.subr.mxu0 0.0
    %118 = vmatpush1.msra.mxu0 0.0
    %119 = vmatprep.subr.mxu0 0.0
    %120 = vmatpush1.msra.mxu0 0.0
    %121 = vmatprep.subr.mxu0 0.0
    %122 = vmatpush1.msra.mxu0 0.0
    %123 = vmatprep.subr.mxu0 0.0
    %124 = vmatpush1.msra.mxu0 0.0
    %125 = vmatprep.subr.mxu0 0.0
    %126 = vmatpush1.msra.mxu0 0.0
    %127 = vmatprep.subr.mxu0 0.0
    %128 = vmatpush1.msra.mxu0 0.0
    %129 = vmatprep.mubr.f32.mxu0 0.0
    %130 = vmatmul.mubr.f32.gmra.mrb[0].mxu0 %v60
    %v131 = vpop.f32.mrb[0].mxu0
    %v132 = vadd.f32 0.0, %v131
    %v133 = vpop.f32.mrb[0].mxu0
    %134 = vmatprep.mubr.f32.mxu0 0.0
    %135 = vmatmul.mubr.f32.gmra.mrb[0].mxu0 %v63
    %v136 = vpop.f32.mrb[0].mxu0
    %v137 = vadd.f32 0.0, %v136
    %v138 = vpop.f32.mrb[0].mxu0
    %139 = vdwg.mxu0
    %v140 = vadd.f32 %v50, %v132
    %v141 = vadd.f32 %v51, %v137
    %vm142 = vcmask 785408
    %143 = vst.msk [vmem:[#allocation2] sm:$0xff] %vm142, %v140
    %144 = vst.msk [vmem:[#allocation2 + $0x8] sm:$0xff] %vm142, %v141
    // Predicated region
    $region26: #{tpu_custom_call.1} parent=1 // pred_check
      %p145 = pneg %p43
    $region27: #{tpu_custom_call.1} parent=1 // pred_check_branch
      %147 = sbr.rel (%p145) target = $region29
    $region28: #{tpu_custom_call.1} parent=1 // pred_region
      %v148 = vld [vmem:[#allocation2] sm:$0xff]
      %v149 = vld [vmem:[#allocation2 + $0x8] sm:$0xff]
      %v150 = vld [vmem:[%s2] sm:$0x1]
      %v152 = vlaneseq
      %v153 = vshrl.u32 %v152, 7
      %v154 = vsub.s32 0, %v153
      %v155 = vrot.slane %v150, %v154
      %v157 = vadd.f32 %v148, %v155
      %v158 = vadd.f32 %v149, %v155
      %159 = vst.msk [vmem:[#allocation8] sm:$0xff] %vm142, %v157
      %160 = vst.msk [vmem:[#allocation8 + $0x8] sm:$0xff] %vm142, %v158
    $region29: #{tpu_custom_call.1} parent=1 // pred_fallthru
      _
    // Predicated region
    $region30: #{tpu_custom_call.1} parent=1 // pred_check
      _
    $region31: #{tpu_custom_call.1} parent=1 // pred_check_branch
      %162 = sbr.rel (0) target = $region33
    $region32: #{tpu_custom_call.1} parent=1 // pred_region
      %s164 = ssub.s32 256, 256
      %165 = vsyncadd [#allocation5], %s164
      %s166 = sshll.u32 [#allocation8], 4
      %s167 = int_to_ptr.vmem [resolvable:$true] %s166
      %172 = dma.vmem_to_hbm [thread:$0]  %s167, 256, %s3, [#allocation5], 128, 128, 8
    $region33: #{tpu_custom_call.1} parent=1 // pred_fallthru
      _
    // Predicated region
    $region34: #{tpu_custom_call.1} parent=1 // pred_check
      _
    $region35: #{tpu_custom_call.1} parent=1 // pred_check_branch
      %174 = sbr.rel (0) target = $region37
    $region36: #{tpu_custom_call.1} parent=1 // pred_region
      %175 = dma.done [#allocation5], 256
    $region37: #{tpu_custom_call.1} parent=1 // pred_fallthru
      _
    %176 = vsyncpa [#allocation4], 1
    %177 = vsyncpa [#allocation7], 1
    %178 = vsyncpa [#allocation5], 1

</llo_original>
